<compile_context>
chip_gen: v7x
topology: tpu7x:2x2x1
jax: 0.10.0
libtpu: 0.0.40
codegen_flags: <defaults>
</compile_context>

<pallas_src>
import functools

import jax
import jax.numpy as jnp
from jax import lax
from jax.experimental import pallas as pl
from jax.experimental.pallas import tpu as pltpu

LANES = 128            # vreg lane width (last dim)
ROW_ALIGN = 16         # row (sublane) alignment; 16 covers both f32 and bf16 tiling
MAX_TILE_ROWS = 2048   # 2048 rows * 128 lanes = 256K elements / variable / tile
                       # f32: (3, 2048, 128) tile = 3 MiB; in+out double-buffered ~12 MiB
_MIN_PALLAS_B = 65536  # below this, pallas_call launch overhead dominates -> plain jnp
_VMEM_LIMIT = 32 * 1024 * 1024  # raise v5e's 16 MiB scoped default; safe on v6e/v7x


# ----------------------------- kernels -------------------------------------

def _deriv_kernel(sigma, rho, beta, s_ref, o_ref):
    """Lorenz-63 derivative on one (3, TILE_ROWS, 128) block.

    sigma/rho/beta are Python floats baked at trace time (functools.partial).
    s_ref / o_ref: VMEM (3, TILE_ROWS, LANES); row 0=x, 1=y, 2=z.
    """
    x = s_ref[0].astype(jnp.float32)
    y = s_ref[1].astype(jnp.float32)
    z = s_ref[2].astype(jnp.float32)
    o_ref[0] = (sigma * (y - x)).astype(o_ref.dtype)
    o_ref[1] = (x * (rho - z) - y).astype(o_ref.dtype)
    o_ref[2] = (x * y - beta * z).astype(o_ref.dtype)


def _euler_kernel(num_steps, unroll, a, c, d, e, rho, s_ref, o_ref):
    """Fused explicit-Euler integration; state stays VMEM-resident across
    `num_steps` derivative evaluations and only the final state hits HBM.

    Coefficients (folded host-side in double precision):
      a = dt*sigma, c = 1-dt, d = dt, e = 1-dt*beta
    Update (algebraically identical to x += dt*f(x)):
      x' = x + a*(y - x)
      y' = c*y + d*(x*(rho - z))
      z' = e*z + d*(x*y)
    """
    x0 = s_ref[0].astype(jnp.float32)
    y0 = s_ref[1].astype(jnp.float32)
    z0 = s_ref[2].astype(jnp.float32)

    def body(_, carry):
        x, y, z = carry
        xn = x + a * (y - x)
        yn = c * y + d * (x * (rho - z))
        zn = e * z + d * (x * y)
        return xn, yn, zn

    x, y, z = lax.fori_loop(0, num_steps, body, (x0, y0, z0), unroll=unroll)
    o_ref[0] = x.astype(o_ref.dtype)
    o_ref[1] = y.astype(o_ref.dtype)
    o_ref[2] = z.astype(o_ref.dtype)


# --------------------------- tiled launcher ---------------------------------

def _to_tiles(state):
    """(3, B) -> (3, rows_total, 128) with rows_total = num_tiles * tile_rows."""
    b = state.shape[1]
    rows_needed = pl.cdiv(b, LANES)
    rows_a = pl.cdiv(rows_needed, ROW_ALIGN) * ROW_ALIGN
    num_tiles = pl.cdiv(rows_a, MAX_TILE_ROWS)
    tile_rows = pl.cdiv(pl.cdiv(rows_a, num_tiles), ROW_ALIGN) * ROW_ALIGN
    rows_total = num_tiles * tile_rows
    bp = rows_total * LANES
    if bp != b:
        state = jnp.pad(state, ((0, 0), (0, bp - b)))
    return state.reshape(3, rows_total, LANES), b, tile_rows, num_tiles


def _run_tiled(kernel, state, out_dtype):
    """Run `kernel` over a (3, B) state with a 1-D grid of dense row tiles."""
    s3, b, tile_rows, num_tiles = _to_tiles(state)
    rows_total = s3.shape[1]
    spec = pl.BlockSpec((3, tile_rows, LANES), lambda i: (0, i, 0))
    out = pl.pallas_call(
        kernel,
        out_shape=jax.ShapeDtypeStruct(s3.shape, out_dtype),
        grid=(num_tiles,),
        in_specs=[spec],
        out_specs=spec,
        compiler_params=pltpu.CompilerParams(
            dimension_semantics=("parallel",),   # shard row tiles across TCs (v7x)
            vmem_limit_bytes=_VMEM_LIMIT),
    )(s3)
    return out.reshape(3, rows_total * LANES)[:, :b]


# ------------------------------ wrappers ------------------------------------

def _deriv_jnp(state, sigma, rho, beta):
    x, y, z = state.astype(jnp.float32)
    dx = sigma * (y - x)
    dy = x * (rho - z) - y
    dz = x * y - beta * z
    return jnp.stack([dx, dy, dz]).astype(state.dtype)


def lorenz63_forward(t, state, sigma, rho, beta, *, force_pallas=False):
    """Pallas equivalent of Lorenz63.forward(t, state).

    `t` is unused (signature parity).  `state` may be (3,) or (3, B), float32
    or bfloat16; the derivative has the same shape/dtype.  For the standalone
    (HBM-bandwidth-bound) derivative, bf16 state/output is the preferred path
    at large B (compute is f32 inside the kernel either way).
    sigma/rho/beta are treated as compile-time constants (baked into the
    kernel); changing them triggers a recompile.
    """
    del t  # unused
    state = jnp.asarray(state)
    if state.dtype not in (jnp.float32, jnp.bfloat16):
        state = state.astype(jnp.float32)

    squeeze = state.ndim == 1
    if squeeze:
        state = state[:, None]
    assert state.ndim == 2 and state.shape[0] == 3, "state must be (3,) or (3, B)"
    b = state.shape[1]

    if b < _MIN_PALLAS_B and not force_pallas:
        # Small batch: a fused XLA elementwise op beats pallas launch + DMA setup.
        out = _deriv_jnp(state, jnp.float32(sigma), jnp.float32(rho),
                         jnp.float32(beta))
    else:
        kernel = functools.partial(
            _deriv_kernel, float(sigma), float(rho), float(beta))
        out = _run_tiled(kernel, state, state.dtype)

    if squeeze:
        out = out[:, 0]
    return out


def lorenz63_integrate_euler(state, sigma, rho, beta, dt, num_steps):
    """Fused N-step explicit-Euler integration (per-step semantics identical
    to Lorenz63.forward).  State stays VMEM-resident across steps."""
    state = jnp.asarray(state)
    if state.dtype not in (jnp.float32, jnp.bfloat16):
        state = state.astype(jnp.float32)
    assert state.ndim == 2 and state.shape[0] == 3, "state must be (3, B)"

    # Fold dt into the coefficients host-side (double precision) so the
    # per-step constants match the reference within tolerance.
    sigma_f, rho_f, beta_f, dt_f = float(sigma), float(rho), float(beta), float(dt)
    a = dt_f * sigma_f
    c = 1.0 - dt_f
    d = dt_f
    e = 1.0 - dt_f * beta_f

    n = int(num_steps)
    unroll = True if n <= 16 else 8
    kernel = functools.partial(_euler_kernel, n, unroll, a, c, d, e, rho_f)
    return _run_tiled(kernel, state, state.dtype)


# ----------------------------- references ----------------------------------

def lorenz63_reference(t, state, sigma, rho, beta):
    del t
    x, y, z = state
    dx = sigma * (y - x)
    dy = x * (rho - z) - y
    dz = x * y - beta * z
    return jnp.stack([dx, dy, dz])


def euler_reference(state, sigma, rho, beta, dt, num_steps):
    def body(_, s):
        return s + dt * lorenz63_reference(None, s, sigma, rho, beta)
    return lax.fori_loop(0, num_steps, body, state.astype(jnp.float32))


# TODO(synk): nn.Parameter learnability / autograd of sigma, rho, beta is not
# translated; they are baked as compile-time constants in the kernel.

if __name__ == "__main__":
    sigma, rho, beta = 10.0, 28.0, 8.0 / 3.0
    key = jax.random.PRNGKey(0)
    t = jnp.float32(0.0)

    # 1) Pallas derivative, f32, B = 4096 (exactly 32 dense rows -> one tile).
    B = 4096
    state = jax.random.normal(key, (3, B), dtype=jnp.float32)
    out = jax.block_until_ready(
        lorenz63_forward(t, state, sigma, rho, beta, force_pallas=True))
    ref = lorenz63_reference(t, state, sigma, rho, beta)
    assert out.shape == state.shape and out.dtype == state.dtype
    assert jnp.allclose(out, ref, atol=1e-5, rtol=1e-5), "mismatch f32 forward"

    # 2) bf16 I/O path (f32 compute inside the kernel).
    state_bf16 = state.astype(jnp.bfloat16)
    out_bf16 = jax.block_until_ready(
        lorenz63_forward(t, state_bf16, sigma, rho, beta, force_pallas=True))
    ref_bf16 = lorenz63_reference(t, state_bf16.astype(jnp.float32),
                                  sigma, rho, beta)
    assert out_bf16.dtype == jnp.bfloat16
    assert jnp.allclose(out_bf16.astype(jnp.float32), ref_bf16,
                        atol=0.05, rtol=0.02), "mismatch bf16 forward"

    # 3) Non-multiple batch (exercises lane/row padding), B = 1000.
    state_odd = jax.random.normal(jax.random.PRNGKey(1), (3, 1000),
                                  dtype=jnp.float32)
    out_odd = jax.block_until_ready(
        lorenz63_forward(t, state_odd, sigma, rho, beta, force_pallas=True))
    ref_odd = lorenz63_reference(t, state_odd, sigma, rho, beta)
    assert out_odd.shape == state_odd.shape
    assert jnp.allclose(out_odd, ref_odd, atol=1e-5, rtol=1e-5), "mismatch padded"

    # 4) Tiny (3,) path - matches torch usage state=(x, y, z); jnp fallback.
    s1 = jnp.array([1.0, 2.0, 3.0], dtype=jnp.float32)
    out1 = jax.block_until_ready(lorenz63_forward(t, s1, sigma, rho, beta))
    ref1 = lorenz63_reference(t, s1, sigma, rho, beta)
    assert out1.shape == (3,)
    assert jnp.allclose(out1, ref1, atol=1e-5, rtol=1e-5), "mismatch (3,) case"

    # 5) Fused Euler integration (state VMEM-resident across steps).
    dt, n_steps = 0.01, 25
    outN = jax.block_until_ready(
        lorenz63_integrate_euler(state, sigma, rho, beta, dt, n_steps))
    refN = euler_reference(state, sigma, rho, beta, dt, n_steps)
    assert jnp.allclose(outN, refN, atol=1e-3, rtol=1e-3), "mismatch fused Euler"

    print("KERNEL_OK")
</pallas_src>

<mosaic_0001>
module attributes {stable_mosaic.version = 11 : i64} {
  func.func @_deriv_kernel(%arg0: i32, %arg1: memref<3x32x128xf32, #tpu.memory_space<vmem>>, %arg2: memref<3x32x128xf32, #tpu.memory_space<vmem>>) attributes {dimension_semantics = [#tpu.dimension_semantics<parallel>], iteration_bounds = array<i64: 1>, scalar_prefetch = 0 : i64, scratch_operands = 0 : i64, tpu.core_type = #tpu.core_type<tc>, window_params = [{transform_indices = @transform_0, window_bounds = array<i64: 3, 32, 128>}, {transform_indices = @transform_1, window_bounds = array<i64: 3, 32, 128>}]} {
    %c0 = arith.constant 0 : index
    %c0_0 = arith.constant 0 : index
    %c0_1 = arith.constant 0 : index
    %0 = vector.load %arg1[%c0, %c0_0, %c0_1] : memref<3x32x128xf32, #tpu.memory_space<vmem>>, vector<1x32x128xf32>
    %1 = vector.shape_cast %0 : vector<1x32x128xf32> to vector<32x128xf32>
    %c1 = arith.constant 1 : index
    %c0_2 = arith.constant 0 : index
    %c0_3 = arith.constant 0 : index
    %2 = vector.load %arg1[%c1, %c0_2, %c0_3] : memref<3x32x128xf32, #tpu.memory_space<vmem>>, vector<1x32x128xf32>
    %3 = vector.shape_cast %2 : vector<1x32x128xf32> to vector<32x128xf32>
    %c2 = arith.constant 2 : index
    %c0_4 = arith.constant 0 : index
    %c0_5 = arith.constant 0 : index
    %4 = vector.load %arg1[%c2, %c0_4, %c0_5] : memref<3x32x128xf32, #tpu.memory_space<vmem>>, vector<1x32x128xf32>
    %5 = vector.shape_cast %4 : vector<1x32x128xf32> to vector<32x128xf32>
    %6 = arith.subf %3, %1 : vector<32x128xf32>
    %cst = arith.constant 1.000000e+01 : f32
    %7 = vector.broadcast %cst : f32 to vector<32x128xf32>
    %8 = arith.mulf %7, %6 : vector<32x128xf32>
    %c0_6 = arith.constant 0 : index
    %c0_7 = arith.constant 0 : index
    %c0_8 = arith.constant 0 : index
    %9 = vector.load %arg2[%c0_6, %c0_7, %c0_8] : memref<3x32x128xf32, #tpu.memory_space<vmem>>, vector<1x32x128xf32>
    %10 = vector.shape_cast %9 : vector<1x32x128xf32> to vector<32x128xf32>
    %11 = vector.shape_cast %8 : vector<32x128xf32> to vector<1x32x128xf32>
    tpu.vector_store %arg2[%c0_6, %c0_7, %c0_8], %11 {strides = array<i32>} : memref<3x32x128xf32, #tpu.memory_space<vmem>>, vector<1x32x128xf32>,
    %cst_9 = arith.constant 2.800000e+01 : f32
    %12 = vector.broadcast %cst_9 : f32 to vector<32x128xf32>
    %13 = arith.subf %12, %5 : vector<32x128xf32>
    %14 = arith.mulf %1, %13 : vector<32x128xf32>
    %15 = arith.subf %14, %3 : vector<32x128xf32>
    %c1_10 = arith.constant 1 : index
    %c0_11 = arith.constant 0 : index
    %c0_12 = arith.constant 0 : index
    %16 = vector.load %arg2[%c1_10, %c0_11, %c0_12] : memref<3x32x128xf32, #tpu.memory_space<vmem>>, vector<1x32x128xf32>
    %17 = vector.shape_cast %16 : vector<1x32x128xf32> to vector<32x128xf32>
    %18 = vector.shape_cast %15 : vector<32x128xf32> to vector<1x32x128xf32>
    tpu.vector_store %arg2[%c1_10, %c0_11, %c0_12], %18 {strides = array<i32>} : memref<3x32x128xf32, #tpu.memory_space<vmem>>, vector<1x32x128xf32>,
    %19 = arith.mulf %1, %3 : vector<32x128xf32>
    %cst_13 = arith.constant 2.66666675 : f32
    %20 = vector.broadcast %cst_13 : f32 to vector<32x128xf32>
    %21 = arith.mulf %20, %5 : vector<32x128xf32>
    %22 = arith.subf %19, %21 : vector<32x128xf32>
    %c2_14 = arith.constant 2 : index
    %c0_15 = arith.constant 0 : index
    %c0_16 = arith.constant 0 : index
    %23 = vector.load %arg2[%c2_14, %c0_15, %c0_16] : memref<3x32x128xf32, #tpu.memory_space<vmem>>, vector<1x32x128xf32>
    %24 = vector.shape_cast %23 : vector<1x32x128xf32> to vector<32x128xf32>
    %25 = vector.shape_cast %22 : vector<32x128xf32> to vector<1x32x128xf32>
    tpu.vector_store %arg2[%c2_14, %c0_15, %c0_16], %25 {strides = array<i32>} : memref<3x32x128xf32, #tpu.memory_space<vmem>>, vector<1x32x128xf32>,
    return
  }
  func.func @transform_0(%arg0: i32) -> (i32, i32, i32) {
    %c0_i32 = arith.constant 0 : i32
    %c0_i32_0 = arith.constant 0 : i32
    %c0_i32_1 = arith.constant 0 : i32
    return %c0_i32, %arg0, %c0_i32_0 : i32, i32, i32
  }
  func.func @transform_1(%arg0: i32) -> (i32, i32, i32) {
    %c0_i32 = arith.constant 0 : i32
    %c0_i32_0 = arith.constant 0 : i32
    %c0_i32_1 = arith.constant 0 : i32
    return %c0_i32, %arg0, %c0_i32_0 : i32, i32, i32
  }
}

</mosaic_0001>

<llo_original>
// kernel: tpu_custom_call.1
$region0: #{tpu_custom_call.1}
  #allocation0 [shape = 'u32[]', space=smem, size = 0x4, offset = 0x4, fixed_abs, tag = 'smem constant byte address 0x4 - core index']
  #allocation1 [shape = 'u32[144,128]{1,0:T(1,128)}', space=vmem, size = 0x12000, scoped, tag = 'internal scratch']
  %s0 = inlined_call_operand.hbm [shape: f32[3,32,128], index: 0, kind: input, shape index: {}]
  %s1 = inlined_call_operand.hbm [shape: f32[3,32,128], index: 1, kind: output, shape index: {}]
  %s2 = sld [smem:[#allocation0]]
  $region18: #{tpu_custom_call.1} parent=0
    _
  %s4 = ssub.s32 1, %s2
  %s5 = scalar_select 0, %s4, %s2
  $region1: #{tpu_custom_call.1} parent=0
    #allocation2 [shape = 'u8[49152]{0}', space=vmem, size = 0xc000, scoped, tag = 'input window, operand 0, single buffered']
    #allocation3 [shape = 's32[1]{0}', space=sflag, size = 0x4, scoped, tag = 'scoped memory for tpu_custom_call.1']
    #allocation4 [shape = 's32[1]{0}', space=sflag, size = 0x4, scoped, tag = 'scoped memory for tpu_custom_call.1']
    #allocation5 [shape = 'u8[49152]{0}', space=vmem, size = 0xc000, scoped, tag = 'output window, operand 0, single buffered']
    %6 = vsyncpa [#allocation3], 0
    %7 = vsyncpa [#allocation4], 0
    // Predicated region
    $region2: #{tpu_custom_call.1} parent=1 // pred_check
      _
    $region3: #{tpu_custom_call.1} parent=1 // pred_check_branch
      %9 = sbr.rel (0) target = $region5
    $region4: #{tpu_custom_call.1} parent=1 // pred_region
      %s11 = ssub.s32 1536, 1536
      %12 = vsyncadd [#allocation3], %s11
      %s13 = sshll.u32 [#allocation2], 4
      %s14 = int_to_ptr.vmem [resolvable:$true] %s13
      %19 = dma.hbm_to_vmem [thread:$0]  %s0, 1536, %s14, [#allocation3], 128, 128, 8
    $region5: #{tpu_custom_call.1} parent=1 // pred_fallthru
      _
    // Predicated region
    $region6: #{tpu_custom_call.1} parent=1 // pred_check
      _
    $region7: #{tpu_custom_call.1} parent=1 // pred_check_branch
      %21 = sbr.rel (0) target = $region9
    $region8: #{tpu_custom_call.1} parent=1 // pred_region
      %22 = dma.done [#allocation3], 1536
    $region9: #{tpu_custom_call.1} parent=1 // pred_fallthru
      _
    %v23 = vld [vmem:[#allocation2] sm:$0xff]
    %v24 = vld [vmem:[#allocation2 + $0x8] sm:$0xff]
    %v25 = vld [vmem:[#allocation2 + $0x10] sm:$0xff]
    %v26 = vld [vmem:[#allocation2 + $0x18] sm:$0xff]
    %s27 = scalar_lea.vmem [#allocation2], 32
    %v28 = vld [vmem:[%s27] sm:$0xff]
    %v29 = vld [vmem:[%s27 + $0x8] sm:$0xff]
    %v30 = vld [vmem:[%s27 + $0x10] sm:$0xff]
    %v31 = vld [vmem:[%s27 + $0x18] sm:$0xff]
    %s32 = scalar_lea.vmem [#allocation2], 64
    %v33 = vld [vmem:[%s32] sm:$0xff]
    %v34 = vld [vmem:[%s32 + $0x8] sm:$0xff]
    %v35 = vld [vmem:[%s32 + $0x10] sm:$0xff]
    %v36 = vld [vmem:[%s32 + $0x18] sm:$0xff]
    %v37 = vsub.f32 %v28, %v23
    %v38 = vsub.f32 %v29, %v24
    %v39 = vsub.f32 %v30, %v25
    %v40 = vsub.f32 %v31, %v26
    %v41 = vmul.f32 %v37, 10.0
    %v42 = vmul.f32 %v38, 10.0
    %v43 = vmul.f32 %v39, 10.0
    %v44 = vmul.f32 %v40, 10.0
    %45 = vst [vmem:[#allocation5] sm:$0xff] %v41
    %46 = vst [vmem:[#allocation5 + $0x8] sm:$0xff] %v42
    %47 = vst [vmem:[#allocation5 + $0x10] sm:$0xff] %v43
    %48 = vst [vmem:[#allocation5 + $0x18] sm:$0xff] %v44
    %v49 = vsub.f32 28.0, %v33
    %v50 = vsub.f32 28.0, %v34
    %v51 = vsub.f32 28.0, %v35
    %v52 = vsub.f32 28.0, %v36
    %v53 = vmul.f32 %v23, %v49
    %v54 = vmul.f32 %v24, %v50
    %v55 = vmul.f32 %v25, %v51
    %v56 = vmul.f32 %v26, %v52
    %v57 = vsub.f32 %v53, %v28
    %v58 = vsub.f32 %v54, %v29
    %v59 = vsub.f32 %v55, %v30
    %v60 = vsub.f32 %v56, %v31
    %s61 = scalar_lea.vmem [#allocation5], 32
    %62 = vst [vmem:[%s61] sm:$0xff] %v57
    %63 = vst [vmem:[%s61 + $0x8] sm:$0xff] %v58
    %64 = vst [vmem:[%s61 + $0x10] sm:$0xff] %v59
    %65 = vst [vmem:[%s61 + $0x18] sm:$0xff] %v60
    %v66 = vmul.f32 %v23, %v28
    %v67 = vmul.f32 %v24, %v29
    %v68 = vmul.f32 %v25, %v30
    %v69 = vmul.f32 %v26, %v31
    %v70 = vmul.f32 %v33, 2.6666667
    %v71 = vmul.f32 %v34, 2.6666667
    %v72 = vmul.f32 %v35, 2.6666667
    %v73 = vmul.f32 %v36, 2.6666667
    %v74 = vsub.f32 %v66, %v70
    %v75 = vsub.f32 %v67, %v71
    %v76 = vsub.f32 %v68, %v72
    %v77 = vsub.f32 %v69, %v73
    %s78 = scalar_lea.vmem [#allocation5], 64
    %79 = vst [vmem:[%s78] sm:$0xff] %v74
    %80 = vst [vmem:[%s78 + $0x8] sm:$0xff] %v75
    %81 = vst [vmem:[%s78 + $0x10] sm:$0xff] %v76
    %82 = vst [vmem:[%s78 + $0x18] sm:$0xff] %v77
    // Predicated region
    $region10: #{tpu_custom_call.1} parent=1 // pred_check
      _
    $region11: #{tpu_custom_call.1} parent=1 // pred_check_branch
      %84 = sbr.rel (0) target = $region13
    $region12: #{tpu_custom_call.1} parent=1 // pred_region
      %s86 = ssub.s32 1536, 1536
      %87 = vsyncadd [#allocation4], %s86
      %s88 = sshll.u32 [#allocation5], 4
      %s89 = int_to_ptr.vmem [resolvable:$true] %s88
      %94 = dma.vmem_to_hbm [thread:$0]  %s89, 1536, %s1, [#allocation4], 128, 128, 8
    $region13: #{tpu_custom_call.1} parent=1 // pred_fallthru
      _
    // Predicated region
    $region14: #{tpu_custom_call.1} parent=1 // pred_check
      _
    $region15: #{tpu_custom_call.1} parent=1 // pred_check_branch
      %96 = sbr.rel (0) target = $region17
    $region16: #{tpu_custom_call.1} parent=1 // pred_region
      %97 = dma.done [#allocation4], 1536
    $region17: #{tpu_custom_call.1} parent=1 // pred_fallthru
      _
    %98 = vsyncpa [#allocation3], 1
    %99 = vsyncpa [#allocation4], 1

</llo_original>
